<compile_context>
chip_gen: v7x
topology: tpu7x:2x2x1
jax: 0.10.0
libtpu: 0.0.40
codegen_flags: <defaults>
</compile_context>

<pallas_src>
import functools
import math

import jax
import jax.numpy as jnp
from jax import lax
from jax.experimental import pallas as pl
from jax.experimental.pallas import tpu as pltpu

_LANE = 128
_FOLD = 8                              # f32 sublane-group size used for the fold
_CHUNK_ROWS = 128                      # rows per fori_loop iteration (vreg-sized temps)
_MAX_BLOCK_BYTES = 4 * 1024 * 1024     # per-input HBM block size target


def _round_up(x, m):
    return ((x + m - 1) // m) * m


def _pg_loss_partial_kernel(p_ref, r_ref, o_ref, *, tile_rows, chunk_rows,
                            total_rows):
    """One grid step: (tile_rows, 128) block -> (8, 128) f32 partial sum."""
    block_row0 = pl.program_id(0) * tile_rows
    n_chunks = tile_rows // chunk_rows          # static

    def body(c, acc):
        rs = pl.multiple_of(c * chunk_rows, chunk_rows)
        p = p_ref[pl.ds(rs, chunk_rows), :].astype(jnp.float32)
        r = r_ref[pl.ds(rs, chunk_rows), :].astype(jnp.float32)
        # Mask the ragged tail: rows at/after `total_rows` are Pallas OOB
        # garbage in the last block and must not enter the sum.
        limit = total_rows - (block_row0 + rs)          # scalar
        row_in_chunk = lax.broadcasted_iota(jnp.int32, (chunk_rows, _LANE), 0)
        v = jnp.where(row_in_chunk < limit, jnp.log(p + 1e-06) * r, 0.0)
        # Sublane-group fold: (chunk,128) -> (chunk//8, 8, 128) -> (8,128).
        # Pure elementwise vreg adds, no cross-lane XLU work.
        folded = jnp.sum(v.reshape(chunk_rows // _FOLD, _FOLD, _LANE), axis=0)
        return acc + folded

    o_ref[...] = lax.fori_loop(0, n_chunks, body,
                               jnp.zeros((_FOLD, _LANE), jnp.float32))


def pg_loss(action_prob, reward):
    """-mean(log(action_prob + 1e-6) * reward) over all elements, any shape."""
    assert action_prob.shape == reward.shape
    n = int(math.prod(action_prob.shape))
    assert n > 0

    itemsize = jnp.dtype(action_prob.dtype).itemsize
    sub = {4: 8, 2: 16, 1: 32}.get(itemsize, 8)     # dtype-aware sublane packing
    max_tile_rows = max(sub, _MAX_BLOCK_BYTES // (_LANE * itemsize))

    p = action_prob.reshape(-1)
    r = reward.reshape(-1)
    # Minimal padding: only to the next multiple of 128 (at most 127 elements),
    # and only when needed.  Pad contributes exactly 0: log(1 + 1e-6) * 0 == 0.
    n_pad = _round_up(n, _LANE)
    if n_pad != n:
        p = jnp.pad(p, (0, n_pad - n), constant_values=1.0)
        r = jnp.pad(r, (0, n_pad - n), constant_values=0.0)
    rows = n_pad // _LANE
    p2 = p.reshape(rows, _LANE)
    r2 = r.reshape(rows, _LANE)

    def pick_tile(t):
        # Valid tile row count: multiple of the dtype sublane group, and a
        # multiple of the chunk size once it exceeds one chunk; capped at the
        # 4 MiB-per-input block budget.
        t = max(sub, _round_up(t, sub))
        if t > _CHUNK_ROWS:
            t = _round_up(t, _CHUNK_ROWS)
        return min(t, max_tile_rows)

    tile_rows = pick_tile(rows)
    # Guarantee >= 2 grid blocks when possible so the "parallel" grid axis can
    # feed both TensorCores on v7x; harmless on single-TC v5e/v6e.
    if _round_up(rows, sub) >= 2 * sub:
        tile_rows = min(tile_rows, pick_tile(pl.cdiv(rows, 2)))
    chunk_rows = min(_CHUNK_ROWS, tile_rows)
    num_blocks = pl.cdiv(rows, tile_rows)

    kernel = functools.partial(
        _pg_loss_partial_kernel,
        tile_rows=tile_rows, chunk_rows=chunk_rows, total_rows=rows)

    cost = pl.CostEstimate(
        flops=4 * n,
        transcendentals=n,
        bytes_accessed=2 * n * itemsize + num_blocks * _FOLD * _LANE * 4)

    partials = pl.pallas_call(
        kernel,
        out_shape=jax.ShapeDtypeStruct((num_blocks, _FOLD, _LANE), jnp.float32),
        grid_spec=pltpu.PrefetchScalarGridSpec(
            num_scalar_prefetch=0,
            grid=(num_blocks,),
            in_specs=[
                pl.BlockSpec((tile_rows, _LANE), lambda i: (i, 0)),
                pl.BlockSpec((tile_rows, _LANE), lambda i: (i, 0)),
            ],
            # Leading dim squeezed -> kernel sees an (8, 128) output ref.
            out_specs=pl.BlockSpec((None, _FOLD, _LANE), lambda i: (i, 0, 0)),
        ),
        compiler_params=pltpu.CompilerParams(
            dimension_semantics=("parallel",),
            vmem_limit_bytes=32 * 1024 * 1024,
        ),
        cost_estimate=cost,
    )(p2, r2)

    # Tiny epilogue reduction + normalization (divide by the true n, not n_pad).
    return -(jnp.sum(partials) / jnp.float32(n))


if __name__ == "__main__":
    key = jax.random.PRNGKey(0)
    k1, k2 = jax.random.split(key)

    # Small, deliberately non-lane-aligned shape to exercise the ragged-tail
    # masking path (n = 1600 -> 64 pad elements, 13 rows, 2 grid blocks).
    B, A = 16, 100
    action_prob = jax.nn.softmax(jax.random.normal(k1, (B, A), jnp.float32), axis=-1)
    reward = jax.random.normal(k2, (B, A), jnp.float32)

    loss = jax.jit(pg_loss)(action_prob, reward)
    jax.block_until_ready(loss)

    # Reference check in plain JAX (matches the PyTorch module).
    ref = -jnp.mean(jnp.log(action_prob + 1e-06) * reward)
    assert jnp.allclose(loss, ref, atol=1e-5, rtol=1e-5), (loss, ref)

    print("KERNEL_OK")
</pallas_src>

<mosaic_0001>
module attributes {stable_mosaic.version = 11 : i64} {
  func.func @_pg_loss_partial_kernel(%arg0: i32, %arg1: memref<8x128xf32, #tpu.memory_space<vmem>>, %arg2: memref<8x128xf32, #tpu.memory_space<vmem>>, %arg3: memref<1x8x128xf32, #tpu.memory_space<vmem>>) attributes {dimension_semantics = [#tpu.dimension_semantics<parallel>], iteration_bounds = array<i64: 2>, scalar_prefetch = 0 : i64, scratch_operands = 0 : i64, tpu.core_type = #tpu.core_type<tc>, window_params = [{transform_indices = @transform_0, window_bounds = array<i64: 8, 128>}, {transform_indices = @transform_1, window_bounds = array<i64: 8, 128>}, {transform_indices = @transform_2, window_bounds = array<i64: 1, 8, 128>}]} {
    %c8_i32 = arith.constant 8 : i32
    %0 = arith.muli %arg0, %c8_i32 : i32
    %cst = arith.constant 0.000000e+00 : f32
    %1 = vector.broadcast %cst : f32 to vector<8x128xf32>
    %c0_i32 = arith.constant 0 : i32
    %c8_i32_0 = arith.constant 8 : i32
    %2 = arith.muli %c0_i32, %c8_i32_0 : i32
    %3 = tpu.assume_multiple %2, 8 : i32
    %4 = arith.index_cast %3 : i32 to index
    %c0 = arith.constant 0 : index
    %5 = vector.load %arg1[%4, %c0] : memref<8x128xf32, #tpu.memory_space<vmem>>, vector<8x128xf32>
    %6 = arith.index_cast %3 : i32 to index
    %c0_1 = arith.constant 0 : index
    %7 = vector.load %arg2[%6, %c0_1] : memref<8x128xf32, #tpu.memory_space<vmem>>, vector<8x128xf32>
    %8 = arith.addi %0, %3 : i32
    %c13_i32 = arith.constant 13 : i32
    %9 = arith.subi %c13_i32, %8 : i32
    %10 = tpu.iota {dimensions = array<i32: 0>} : vector<8x128xi32>
    %11 = vector.broadcast %9 : i32 to vector<8x128xi32>
    %12 = arith.cmpi slt, %10, %11 : vector<8x128xi32>
    %cst_2 = arith.constant 9.99999997E-7 : f32
    %13 = vector.broadcast %cst_2 : f32 to vector<8x128xf32>
    %14 = arith.addf %5, %13 : vector<8x128xf32>
    %15 = math.log %14 : vector<8x128xf32>
    %16 = arith.mulf %15, %7 : vector<8x128xf32>
    %cst_3 = arith.constant 0.000000e+00 : f32
    %17 = vector.broadcast %cst_3 : f32 to vector<8x128xf32>
    %18 = arith.select %12, %16, %17 : vector<8x128xi1>, vector<8x128xf32>
    %19 = vector.shape_cast %18 : vector<8x128xf32> to vector<1x8x128xf32>
    %cst_4 = arith.constant dense<0.000000e+00> : vector<8x128xf32>
    %20 = vector.multi_reduction <add>, %19, %cst_4 [0] : vector<1x8x128xf32> to vector<8x128xf32>
    %21 = arith.addf %1, %20 : vector<8x128xf32>
    %c1_i32 = arith.constant 1 : i32
    %c0_5 = arith.constant 0 : index
    %c0_6 = arith.constant 0 : index
    %c0_7 = arith.constant 0 : index
    %22 = vector.load %arg3[%c0_5, %c0_6, %c0_7] : memref<1x8x128xf32, #tpu.memory_space<vmem>>, vector<1x8x128xf32>
    %23 = vector.shape_cast %22 : vector<1x8x128xf32> to vector<8x128xf32>
    %24 = vector.shape_cast %21 : vector<8x128xf32> to vector<1x8x128xf32>
    tpu.vector_store %arg3[%c0_5, %c0_6, %c0_7], %24 {strides = array<i32>} : memref<1x8x128xf32, #tpu.memory_space<vmem>>, vector<1x8x128xf32>,
    return
  }
  func.func @transform_0(%arg0: i32) -> (i32, i32) {
    %c0_i32 = arith.constant 0 : i32
    %c0_i32_0 = arith.constant 0 : i32
    return %arg0, %c0_i32 : i32, i32
  }
  func.func @transform_1(%arg0: i32) -> (i32, i32) {
    %c0_i32 = arith.constant 0 : i32
    %c0_i32_0 = arith.constant 0 : i32
    return %arg0, %c0_i32 : i32, i32
  }
  func.func @transform_2(%arg0: i32) -> (i32, i32, i32) {
    %c0_i32 = arith.constant 0 : i32
    %c0_i32_0 = arith.constant 0 : i32
    %c0_i32_1 = arith.constant 0 : i32
    return %arg0, %c0_i32, %c0_i32_0 : i32, i32, i32
  }
}

</mosaic_0001>

<llo_original>
// kernel: pg_loss.1
$region0: #{pg_loss.1}
  #allocation0 [shape = 'u32[]', space=smem, size = 0x4, offset = 0x4, fixed_abs, tag = 'smem constant byte address 0x4 - core index']
  #allocation1 [shape = 'u32[144,128]{1,0:T(1,128)}', space=vmem, size = 0x12000, scoped, tag = 'internal scratch']
  %s0 = inlined_call_operand.vmem [shape: f32[13,128], index: 0, kind: input, shape index: {}]
  %s1 = inlined_call_operand.vmem [shape: f32[13,128], index: 1, kind: input, shape index: {}]
  %s2 = inlined_call_operand.vmem [shape: f32[2,8,128], index: 2, kind: output, shape index: {}]
  %s3 = sld [smem:[#allocation0]]
  $region41: #{pg_loss.1} parent=0
    _
  %s5 = ssub.s32 1, %s3
  %s6 = scalar_select 0, %s5, %s3
  loop: start=0, step=1, limit=4
  $region2: #{pg_loss.1} parent=0 // loop_pre_header
    _
  $region3: #{pg_loss.1} parent=0 // loop_header
    %s8 = sphi 0, %s12
    %p9 = scmp.ge.s32.totalorder %s8, 4
    %s18 = sphi 0, %s20
    %s21 = sphi 0, %s18
    %s22 = sphi 0, %s21
    %s38 = sphi 0, %s22
    %s44 = sphi 0, %s46
    %s47 = sphi 0, %s44
    %s48 = sphi 0, %s47
    %s64 = sphi 0, %s48
    %s70 = sphi 0, %s72
    %s73 = sphi 0, %s70
    %s74 = sphi 0, %s73
    %s90 = sphi 0, %s74
  $region4: #{pg_loss.1} parent=0 // loop_header_branch
    %11 = sbr.rel (%p9) target = $region8
  $region5: #{pg_loss.1} parent=0 // loop_body
    %s13 = ssub.s32 %s8, 1
    %s14 = ssub.s32 %s8, 2
    %s15 = sadd.s32 %s8, 1
    %s16 = ssub.s32 %s8, %s15
    %p17 = scmp.eq.s32.totalorder %s16, 0
    %s19 = sadd.s32 %s18, 1
    %s20 = scalar_select %p17, %s18, %s19
    %p23 = pneg %p17
    %p24 = scmp.eq.s32.totalorder %s8, 1
    %p25 = por %p23, %p24
    %p26 = scmp.ne.s32.totalorder %s18, %s21
    %p27 = scmp.eq.s32.totalorder %s8, 0
    %p28 = por %p26, %p27
    %p29 = scmp.ne.s32.totalorder %s18, %s21
    %p30 = scmp.eq.s32.totalorder %s13, 1
    %p31 = por %p29, %p30
    %p32 = scmp.ne.s32.totalorder %s21, %s22
    %p33 = scmp.eq.s32.totalorder %s13, 0
    %p34 = por %p32, %p33
    %p35 = scmp.ne.s32.totalorder %s21, %s22
    %p36 = scmp.eq.s32.totalorder %s14, 1
    %p37 = por %p35, %p36
    %p39 = scmp.ne.s32.totalorder %s22, %s38
    %p40 = scmp.eq.s32.totalorder %s14, 0
    %p41 = por %p39, %p40
    %s42 = ssub.s32 %s8, %s15
    %p43 = scmp.eq.s32.totalorder %s42, 0
    %s45 = sadd.s32 %s44, 1
    %s46 = scalar_select %p43, %s44, %s45
    %p49 = pneg %p43
    %p50 = scmp.eq.s32.totalorder %s8, 1
    %p51 = por %p49, %p50
    %p52 = scmp.ne.s32.totalorder %s44, %s47
    %p53 = scmp.eq.s32.totalorder %s8, 0
    %p54 = por %p52, %p53
    %p55 = scmp.ne.s32.totalorder %s44, %s47
    %p56 = scmp.eq.s32.totalorder %s13, 1
    %p57 = por %p55, %p56
    %p58 = scmp.ne.s32.totalorder %s47, %s48
    %p59 = scmp.eq.s32.totalorder %s13, 0
    %p60 = por %p58, %p59
    %p61 = scmp.ne.s32.totalorder %s47, %s48
    %p62 = scmp.eq.s32.totalorder %s14, 1
    %p63 = por %p61, %p62
    %p65 = scmp.ne.s32.totalorder %s48, %s64
    %p66 = scmp.eq.s32.totalorder %s14, 0
    %p67 = por %p65, %p66
    %s68 = ssub.s32 %s8, %s15
    %p69 = scmp.eq.s32.totalorder %s68, 0
    %s71 = sadd.s32 %s70, 1
    %s72 = scalar_select %p69, %s70, %s71
    %p75 = pneg %p69
    %p76 = scmp.eq.s32.totalorder %s8, 1
    %p77 = por %p75, %p76
    %p78 = scmp.ne.s32.totalorder %s70, %s73
    %p79 = scmp.eq.s32.totalorder %s8, 0
    %p80 = por %p78, %p79
    %p81 = scmp.ne.s32.totalorder %s70, %s73
    %p82 = scmp.eq.s32.totalorder %s13, 1
    %p83 = por %p81, %p82
    %p84 = scmp.ne.s32.totalorder %s73, %s74
    %p85 = scmp.eq.s32.totalorder %s13, 0
    %p86 = por %p84, %p85
    %p87 = scmp.ne.s32.totalorder %s73, %s74
    %p88 = scmp.eq.s32.totalorder %s14, 1
    %p89 = por %p87, %p88
    %p91 = scmp.ne.s32.totalorder %s74, %s90
    %p92 = scmp.eq.s32.totalorder %s14, 0
    %p93 = por %p91, %p92
    %p94 = scmp.le.s32.totalorder 1, %s8
    %p95 = scmp.lt.s32.totalorder %s8, 3
    %p96 = pnand %p94, %p95
    %p97 = pneg %p96
    // Predicated region
    $region9: #{pg_loss.1} parent=5 // pred_check
      _
    $region10: #{pg_loss.1} parent=5 // pred_check_branch
      %99 = sbr.rel (%p96) target = $region12
    $region11: #{pg_loss.1} parent=5 // pred_region
      %s100 = ssub.s32 %s8, 1
    $region12: #{pg_loss.1} parent=5 // pred_fallthru
      _
    %p101 = scmp.lt.s32.totalorder %s8, 2
    // Predicated region
    $region13: #{pg_loss.1} parent=5 // pred_check
      %p102 = pneg %p101
    $region14: #{pg_loss.1} parent=5 // pred_check_branch
      %104 = sbr.rel (%p102) target = $region16
    $region15: #{pg_loss.1} parent=5 // pred_region
      // Predicated region
      $region17: #{pg_loss.1} parent=15 // pred_check
        %p105 = pneg %p28
      $region18: #{pg_loss.1} parent=15 // pred_check_branch
        %107 = sbr.rel (%p105) target = $region20
      $region19: #{pg_loss.1} parent=15 // pred_region
        %p108 = scmp.lt.s32.totalorder %s8, 1
        %s109 = scalar_select %p108, %s8, 1
        %s110 = smul.addr %s109, 8
        %s111 = scalar_lea.vmem %s0, %s110
      $region20: #{pg_loss.1} parent=15 // pred_fallthru
        _
      // Predicated region
      $region21: #{pg_loss.1} parent=15 // pred_check
        %p112 = pneg %p54
      $region22: #{pg_loss.1} parent=15 // pred_check_branch
        %114 = sbr.rel (%p112) target = $region24
      $region23: #{pg_loss.1} parent=15 // pred_region
        %p115 = scmp.lt.s32.totalorder %s8, 1
        %s116 = scalar_select %p115, %s8, 1
        %s117 = smul.addr %s116, 8
        %s118 = scalar_lea.vmem %s1, %s117
      $region24: #{pg_loss.1} parent=15 // pred_fallthru
        _
    $region16: #{pg_loss.1} parent=5 // pred_fallthru
      _
    %p119 = scmp.le.s32.totalorder 1, %s8
    %p120 = scmp.lt.s32.totalorder %s8, 3
    %p121 = pnand %p119, %p120
    %p122 = pneg %p121
    // Predicated region
    $region25: #{pg_loss.1} parent=5 // pred_check
      _
    $region26: #{pg_loss.1} parent=5 // pred_check_branch
      %124 = sbr.rel (%p121) target = $region28
    $region27: #{pg_loss.1} parent=5 // pred_region
      %s125 = ssub.s32 %s8, 1
      %p126 = scmp.lt.s32.totalorder %s13, 1
      %s127 = scalar_select %p126, %s13, 1
      %s128 = smul.addr %s127, 8
      %s129 = scalar_lea.vmem %s0, %s128
      %p130 = pneg %p34
      %p131 = pneg %p31
      %p132 = scmp.lt.s32.totalorder %s13, 1
      %s133 = scalar_select %p132, %s13, 1
      %s134 = smul.addr %s133, 8
      %s135 = scalar_lea.vmem %s1, %s134
      %p136 = pneg %p60
      %p137 = pneg %p57
      %p138 = pneg %p86
      %p139 = pneg %p83
      %p140 = scmp.lt.s32.totalorder %s13, 1
      %s141 = scalar_select %p140, %s13, 1
      %s142 = smul.addr %s141, 8
      %s143 = scalar_lea.vmem %s2, %s142
      %p144 = scmp.lt.s32.totalorder %s13, 1
      %s145 = scalar_select %p144, %s13, 1
      %s146 = smul.addr %s145, 8
      %s147 = scalar_lea.vmem %s0, %s146
      %p148 = scmp.lt.s32.totalorder %s13, 1
      %s149 = scalar_select %p148, %s13, 1
      %s150 = smul.addr %s149, 8
      %s151 = scalar_lea.vmem %s1, %s150
      %p152 = scmp.lt.s32.totalorder %s13, 1
      %s153 = scalar_select %p152, %s13, 1
      %s154 = smul.addr %s153, 8
      %s155 = scalar_lea.vmem %s2, %s154
      %s156 = smul.u32 %s13, 8
      %v157 = vld [vmem:[%s147] sm:$0xff]
      %v158 = vld [vmem:[%s151] sm:$0xff]
      %s159 = sadd.s32 %s156, 0
      %s160 = ssub.s32 13, %s159
      %v161 = vlaneseq
      %v162 = vshrl.u32 %v161, 7
      %v163 = vstv %s160
      %vm164 = vcmp.lt.s32.totalorder %v162, %v163
      %v165 = vadd.f32 %v157, 1e-06
      %v166 = vlog2.pop %v165
      %v167 = vmul.f32 %v166, 0.6931472
      %v168 = vmul.f32 %v167, %v158
      %v169 = vsel %vm164, %v168, 0.0
      %v170 = vadd.f32 %v169, 0.0
      %v171 = vadd.f32 %v170, 0.0
      %172 = vst [vmem:[%s155] sm:$0xff] %v171
      %p173 = scmp.lt.s32.totalorder %s13, 1
      %s174 = scalar_select %p173, %s13, 1
      %s175 = smul.addr %s174, 8
      %s176 = scalar_lea.vmem %s2, %s175
      // Predicated region
      $region29: #{pg_loss.1} parent=27 // pred_check
        %p177 = pneg %p83
      $region30: #{pg_loss.1} parent=27 // pred_check_branch
        %179 = sbr.rel (%p177) target = $region32
      $region31: #{pg_loss.1} parent=27 // pred_region
        _
      $region32: #{pg_loss.1} parent=27 // pred_fallthru
        _
    $region28: #{pg_loss.1} parent=5 // pred_fallthru
      _
    %p180 = scmp.le.s32.totalorder 2, %s8
    // Predicated region
    $region33: #{pg_loss.1} parent=5 // pred_check
      %p181 = pneg %p180
    $region34: #{pg_loss.1} parent=5 // pred_check_branch
      %183 = sbr.rel (%p181) target = $region36
    $region35: #{pg_loss.1} parent=5 // pred_region
      %s184 = ssub.s32 %s8, 2
      // Predicated region
      $region37: #{pg_loss.1} parent=35 // pred_check
        %p185 = pneg %p89
      $region38: #{pg_loss.1} parent=35 // pred_check_branch
        %187 = sbr.rel (%p185) target = $region40
      $region39: #{pg_loss.1} parent=35 // pred_region
        %p188 = scmp.lt.s32.totalorder %s14, 1
        %s189 = scalar_select %p188, %s14, 1
        %s190 = smul.addr %s189, 8
        %s191 = scalar_lea.vmem %s2, %s190
      $region40: #{pg_loss.1} parent=35 // pred_fallthru
        _
    $region36: #{pg_loss.1} parent=5 // pred_fallthru
      _
  $region6: #{pg_loss.1} parent=0 // loop_footer
    %s12 = sadd.s32 1, %s8
  $region7: #{pg_loss.1} parent=0 // loop_footer_branch
    %7 = sbr.rel target = $region3
  $region8: #{pg_loss.1} parent=0 // loop_exit
    _

</llo_original>
